<compile_context>
chip_gen: v7x
topology: tpu7x:2x2x1
jax: 0.10.0
libtpu: 0.0.40
codegen_flags: <defaults>
</compile_context>

<pallas_src>
import functools

import jax
import jax.numpy as jnp
import numpy as np
from jax.experimental import pallas as pl
from jax.experimental.pallas import tpu as pltpu


def _agcn_kernel(x_ref, emb_ref, nv1_ref, nv2_ref, pool_ref, bias_ref, out_ref,
                 *, batch, n, cheb_k, dim_in, dim_out, embed_dim):
    f32 = jnp.float32

    # ---------- adaptive supports S_1 .. S_{K-1} (k = 0 identity skipped) ----------
    cheb = []
    if cheb_k >= 2:  # cheb_k == 1 needs no adjacency at all
        adj = jnp.dot(nv1_ref[...], nv2_ref[...], preferred_element_type=f32)
        adj = jnp.maximum(adj, 0.0)
        m = jnp.max(adj, axis=1, keepdims=True)
        e = jnp.exp(adj - m)
        # Exact divide (not pl.reciprocal(approx=True)): the approx table lookup
        # has ~1e-3 relative error which is visible in the final output; this
        # softmax runs once on an [N, N] tile so the exact path costs nothing.
        s = e / jnp.sum(e, axis=1, keepdims=True)
        cheb.append(s)
        if cheb_k >= 3:
            # identity only seeds the recursion; it is never matmul'ed with x
            row = jax.lax.broadcasted_iota(jnp.int32, (n, n), 0)
            col = jax.lax.broadcasted_iota(jnp.int32, (n, n), 1)
            prev_prev = (row == col).astype(f32)
            prev = s
            for _ in range(2, cheb_k):
                nxt = 2.0 * jnp.dot(s, prev, preferred_element_type=f32) - prev_prev
                cheb.append(nxt)
                prev_prev, prev = prev, nxt

    # ---------- graph-conv inputs: x_g[b*N + n, k*Ci + i] ----------
    if cheb:
        s_cat = cheb[0] if len(cheb) == 1 else jnp.concatenate(cheb, axis=0)  # [(K-1)*N, N]
    blocks = []
    for b in range(batch):
        xb = x_ref[b]                                            # [N, Ci]  (the k = 0 term)
        cols = [xb]
        if cheb:
            g = jnp.dot(s_cat, xb, preferred_element_type=f32)   # [(K-1)*N, Ci], one dot per b
            for k in range(len(cheb)):
                cols.append(g[k * n:(k + 1) * n, :])
        blocks.append(cols[0] if len(cols) == 1 else jnp.concatenate(cols, axis=1))
    x_g = blocks[0] if batch == 1 else jnp.concatenate(blocks, axis=0)        # [B*N, K*Ci]

    # ---------- (k,i) contraction on the MXU against the raw pool ----------
    # pool_ref[k*Ci+i, d*Co+o] = weights_pool[d,k,i,o];  bias_ref[0, d*Co+o] = bias_pool[d,o]
    t = jnp.dot(x_g, pool_ref[...], preferred_element_type=f32) + bias_ref[...]  # [B*N, D*Co]

    # ---------- small d-reduction with node embeddings on the VPU ----------
    # Done once on [B*N, ...] rows, so the D static lane slices are NOT re-emitted per batch.
    emb = emb_ref[...]                                                          # [N, D]
    emb_t = emb if batch == 1 else jnp.concatenate([emb] * batch, axis=0)       # [B*N, D]
    acc = emb_t[:, 0:1] * t[:, 0:dim_out]
    for d in range(1, embed_dim):
        acc = acc + emb_t[:, d:d + 1] * t[:, d * dim_out:(d + 1) * dim_out]     # [B*N, Co]

    out_ref[...] = acc.astype(out_ref.dtype)                                    # single full store


def agcn_forward(x, node_embeddings, nodevec1, nodevec2, weights_pool, bias_pool, cheb_k):
    b, n, ci = x.shape
    d = node_embeddings.shape[1]
    co = bias_pool.shape[1]

    # Wrapper-side layout plumbing (pure transpose/reshape of parameters, done once):
    # pool_r[k*Ci+i, d*Co+o] = weights_pool[d,k,i,o];  bias_r[0, d*Co+o] = bias_pool[d,o]
    pool_r = jnp.transpose(weights_pool, (1, 2, 0, 3)).reshape(cheb_k * ci, d * co)
    bias_r = bias_pool.reshape(1, d * co)

    vmem = pl.BlockSpec(memory_space=pltpu.MemorySpace.VMEM)
    # TODO(synk): for production graph sizes (N in the hundreds+), add a
    # (batch, node-tile) grid with (8,128)-aligned blocks, keep supports in HBM
    # (pl.ANY + pltpu.emit_pipeline), mark the batch axis "parallel" for v7x's
    # two TensorCores, set vmem_limit_bytes (v7x has 64 MiB VMEM), and feed the
    # MXU bf16 operands on v5e. At these tiny shapes whole-array VMEM is right.
    out_flat = pl.pallas_call(
        functools.partial(_agcn_kernel, batch=b, n=n, cheb_k=cheb_k,
                          dim_in=ci, dim_out=co, embed_dim=d),
        out_shape=jax.ShapeDtypeStruct((b * n, co), jnp.float32),
        in_specs=[vmem] * 6,
        out_specs=vmem,
    )(x, node_embeddings, nodevec1, nodevec2, pool_r, bias_r)
    return out_flat.reshape(b, n, co)   # row-major identical -> free metadata reshape


def agcn_reference(x, node_embeddings, nodevec1, nodevec2, weights_pool, bias_pool, cheb_k):
    n = node_embeddings.shape[0]
    supports = jax.nn.softmax(jax.nn.relu(nodevec1 @ nodevec2), axis=1)
    support_set = [jnp.eye(n, dtype=jnp.float32), supports]
    for _ in range(2, cheb_k):
        support_set.append(2.0 * supports @ support_set[-1] - support_set[-2])
    supports = jnp.stack(support_set, axis=0)
    weights = jnp.einsum('nd,dkio->nkio', node_embeddings, weights_pool)
    bias = node_embeddings @ bias_pool
    x_g = jnp.einsum('knm,bmc->bknc', supports, x)
    x_g = jnp.transpose(x_g, (0, 2, 1, 3))
    return jnp.einsum('bnki,nkio->bno', x_g, weights) + bias


if __name__ == "__main__":
    B, N, C_IN, C_OUT = 2, 16, 4, 8
    CHEB_K, EMBED_DIM, VEC_DIM = 3, 10, 8

    key = jax.random.PRNGKey(0)
    ks = jax.random.split(key, 6)
    x = jax.random.normal(ks[0], (B, N, C_IN), dtype=jnp.float32)
    node_embeddings = jax.random.normal(ks[1], (N, EMBED_DIM), dtype=jnp.float32)
    nodevec1 = jax.random.normal(ks[2], (N, VEC_DIM), dtype=jnp.float32)
    nodevec2 = jax.random.normal(ks[3], (VEC_DIM, N), dtype=jnp.float32)
    weights_pool = jax.random.normal(
        ks[4], (EMBED_DIM, CHEB_K, C_IN, C_OUT), dtype=jnp.float32
    ) * 0.1
    bias_pool = jax.random.normal(ks[5], (EMBED_DIM, C_OUT), dtype=jnp.float32) * 0.1

    out = agcn_forward(
        x, node_embeddings, nodevec1, nodevec2, weights_pool, bias_pool, CHEB_K
    )
    out = jax.block_until_ready(out)

    ref = agcn_reference(
        x, node_embeddings, nodevec1, nodevec2, weights_pool, bias_pool, CHEB_K
    )
    # Only remaining numerical difference vs. the reference is the (exact, f32)
    # reassociation of the (d,k,i) contraction, which is well below 1e-4.
    np.testing.assert_allclose(np.asarray(out), np.asarray(ref), rtol=1e-4, atol=1e-4)
    print("KERNEL_OK")
</pallas_src>

<mosaic_0001>
module attributes {stable_mosaic.version = 11 : i64} {
  func.func @_agcn_kernel(%arg0: memref<2x16x4xf32, #tpu.memory_space<vmem>>, %arg1: memref<16x10xf32, #tpu.memory_space<vmem>>, %arg2: memref<16x8xf32, #tpu.memory_space<vmem>>, %arg3: memref<8x16xf32, #tpu.memory_space<vmem>>, %arg4: memref<12x80xf32, #tpu.memory_space<vmem>>, %arg5: memref<1x80xf32, #tpu.memory_space<vmem>>, %arg6: memref<32x8xf32, #tpu.memory_space<vmem>>) attributes {dimension_semantics = [], scalar_prefetch = 0 : i64, scratch_operands = 0 : i64, tpu.core_type = #tpu.core_type<tc>} {
    %c0 = arith.constant 0 : index
    %c0_0 = arith.constant 0 : index
    %0 = vector.load %arg2[%c0, %c0_0] : memref<16x8xf32, #tpu.memory_space<vmem>>, vector<16x8xf32>
    %c0_1 = arith.constant 0 : index
    %c0_2 = arith.constant 0 : index
    %1 = vector.load %arg3[%c0_1, %c0_2] : memref<8x16xf32, #tpu.memory_space<vmem>>, vector<8x16xf32>
    %cst = arith.constant dense<0.000000e+00> : vector<16x16xf32>
    %2 = tpu.matmul %0, %1, %cst {dimension_numbers = #tpu.dot_dimension_numbers<[1], [0], [0], [1], [0, 0, 1, 1], [], []>} : vector<16x8xf32>, vector<8x16xf32>, vector<16x16xf32> -> vector<16x16xf32>
    %cst_3 = arith.constant 0.000000e+00 : f32
    %3 = vector.broadcast %cst_3 : f32 to vector<16x16xf32>
    %4 = arith.maximumf %2, %3 : vector<16x16xf32>
    %cst_4 = arith.constant dense<0xFF800000> : vector<16xf32>
    %5 = vector.multi_reduction <maximumf>, %4, %cst_4 [1] : vector<16x16xf32> to vector<16xf32>
    %6 = vector.shape_cast %5 : vector<16xf32> to vector<16x1xf32>
    %7 = vector.broadcast %6 : vector<16x1xf32> to vector<16x16xf32>
    %8 = arith.subf %4, %7 : vector<16x16xf32>
    %9 = math.exp %8 : vector<16x16xf32>
    %cst_5 = arith.constant dense<0.000000e+00> : vector<16xf32>
    %10 = vector.multi_reduction <add>, %9, %cst_5 [1] : vector<16x16xf32> to vector<16xf32>
    %11 = vector.shape_cast %10 : vector<16xf32> to vector<16x1xf32>
    %12 = vector.broadcast %11 : vector<16x1xf32> to vector<16x16xf32>
    %13 = arith.divf %9, %12 : vector<16x16xf32>
    %14 = tpu.iota {dimensions = array<i32: 0>} : vector<16x16xi32>
    %15 = tpu.iota {dimensions = array<i32: 1>} : vector<16x16xi32>
    %16 = arith.cmpi eq, %14, %15 : vector<16x16xi32>
    %17 = arith.extui %16 : vector<16x16xi1> to vector<16x16xi32>
    %18 = arith.sitofp %17 : vector<16x16xi32> to vector<16x16xf32>
    %cst_6 = arith.constant dense<0.000000e+00> : vector<16x16xf32>
    %19 = tpu.matmul %13, %13, %cst_6 {dimension_numbers = #tpu.dot_dimension_numbers<[1], [0], [0], [1], [0, 0, 1, 1], [], []>} : vector<16x16xf32>, vector<16x16xf32>, vector<16x16xf32> -> vector<16x16xf32>
    %cst_7 = arith.constant 2.000000e+00 : f32
    %20 = vector.broadcast %cst_7 : f32 to vector<16x16xf32>
    %21 = arith.mulf %20, %19 : vector<16x16xf32>
    %22 = arith.subf %21, %18 : vector<16x16xf32>
    %23 = tpu.concatenate %13, %22 in 0 : vector<16x16xf32>, vector<16x16xf32> -> vector<32x16xf32>
    %c0_8 = arith.constant 0 : index
    %c0_9 = arith.constant 0 : index
    %c0_10 = arith.constant 0 : index
    %24 = vector.load %arg0[%c0_8, %c0_9, %c0_10] : memref<2x16x4xf32, #tpu.memory_space<vmem>>, vector<1x16x4xf32>
    %25 = vector.shape_cast %24 : vector<1x16x4xf32> to vector<16x4xf32>
    %cst_11 = arith.constant dense<0.000000e+00> : vector<32x4xf32>
    %26 = tpu.matmul %23, %25, %cst_11 {dimension_numbers = #tpu.dot_dimension_numbers<[1], [0], [0], [1], [0, 0, 1, 1], [], []>} : vector<32x16xf32>, vector<16x4xf32>, vector<32x4xf32> -> vector<32x4xf32>
    %27 = vector.extract_strided_slice %26 {offsets = [0, 0], sizes = [16, 4], strides = [1, 1]} : vector<32x4xf32> to vector<16x4xf32>
    %28 = vector.extract_strided_slice %26 {offsets = [16, 0], sizes = [16, 4], strides = [1, 1]} : vector<32x4xf32> to vector<16x4xf32>
    %29 = tpu.concatenate %25, %27, %28 in 1 : vector<16x4xf32>, vector<16x4xf32>, vector<16x4xf32> -> vector<16x12xf32>
    %c1 = arith.constant 1 : index
    %c0_12 = arith.constant 0 : index
    %c0_13 = arith.constant 0 : index
    %30 = vector.load %arg0[%c1, %c0_12, %c0_13] : memref<2x16x4xf32, #tpu.memory_space<vmem>>, vector<1x16x4xf32>
    %31 = vector.shape_cast %30 : vector<1x16x4xf32> to vector<16x4xf32>
    %cst_14 = arith.constant dense<0.000000e+00> : vector<32x4xf32>
    %32 = tpu.matmul %23, %31, %cst_14 {dimension_numbers = #tpu.dot_dimension_numbers<[1], [0], [0], [1], [0, 0, 1, 1], [], []>} : vector<32x16xf32>, vector<16x4xf32>, vector<32x4xf32> -> vector<32x4xf32>
    %33 = vector.extract_strided_slice %32 {offsets = [0, 0], sizes = [16, 4], strides = [1, 1]} : vector<32x4xf32> to vector<16x4xf32>
    %34 = vector.extract_strided_slice %32 {offsets = [16, 0], sizes = [16, 4], strides = [1, 1]} : vector<32x4xf32> to vector<16x4xf32>
    %35 = tpu.concatenate %31, %33, %34 in 1 : vector<16x4xf32>, vector<16x4xf32>, vector<16x4xf32> -> vector<16x12xf32>
    %36 = tpu.concatenate %29, %35 in 0 : vector<16x12xf32>, vector<16x12xf32> -> vector<32x12xf32>
    %c0_15 = arith.constant 0 : index
    %c0_16 = arith.constant 0 : index
    %37 = vector.load %arg4[%c0_15, %c0_16] : memref<12x80xf32, #tpu.memory_space<vmem>>, vector<12x80xf32>
    %cst_17 = arith.constant dense<0.000000e+00> : vector<32x80xf32>
    %38 = tpu.matmul %36, %37, %cst_17 {dimension_numbers = #tpu.dot_dimension_numbers<[1], [0], [0], [1], [0, 0, 1, 1], [], []>} : vector<32x12xf32>, vector<12x80xf32>, vector<32x80xf32> -> vector<32x80xf32>
    %c0_18 = arith.constant 0 : index
    %c0_19 = arith.constant 0 : index
    %39 = vector.load %arg5[%c0_18, %c0_19] : memref<1x80xf32, #tpu.memory_space<vmem>>, vector<1x80xf32>
    %40 = vector.broadcast %39 : vector<1x80xf32> to vector<32x80xf32>
    %41 = arith.addf %38, %40 : vector<32x80xf32>
    %c0_20 = arith.constant 0 : index
    %c0_21 = arith.constant 0 : index
    %42 = vector.load %arg1[%c0_20, %c0_21] : memref<16x10xf32, #tpu.memory_space<vmem>>, vector<16x10xf32>
    %43 = tpu.concatenate %42, %42 in 0 : vector<16x10xf32>, vector<16x10xf32> -> vector<32x10xf32>
    %44 = vector.extract_strided_slice %43 {offsets = [0, 0], sizes = [32, 1], strides = [1, 1]} : vector<32x10xf32> to vector<32x1xf32>
    %45 = vector.extract_strided_slice %41 {offsets = [0, 0], sizes = [32, 8], strides = [1, 1]} : vector<32x80xf32> to vector<32x8xf32>
    %46 = vector.broadcast %44 : vector<32x1xf32> to vector<32x8xf32>
    %47 = arith.mulf %46, %45 : vector<32x8xf32>
    %48 = vector.extract_strided_slice %43 {offsets = [0, 1], sizes = [32, 1], strides = [1, 1]} : vector<32x10xf32> to vector<32x1xf32>
    %49 = vector.extract_strided_slice %41 {offsets = [0, 8], sizes = [32, 8], strides = [1, 1]} : vector<32x80xf32> to vector<32x8xf32>
    %50 = vector.broadcast %48 : vector<32x1xf32> to vector<32x8xf32>
    %51 = arith.mulf %50, %49 : vector<32x8xf32>
    %52 = arith.addf %47, %51 : vector<32x8xf32>
    %53 = vector.extract_strided_slice %43 {offsets = [0, 2], sizes = [32, 1], strides = [1, 1]} : vector<32x10xf32> to vector<32x1xf32>
    %54 = vector.extract_strided_slice %41 {offsets = [0, 16], sizes = [32, 8], strides = [1, 1]} : vector<32x80xf32> to vector<32x8xf32>
    %55 = vector.broadcast %53 : vector<32x1xf32> to vector<32x8xf32>
    %56 = arith.mulf %55, %54 : vector<32x8xf32>
    %57 = arith.addf %52, %56 : vector<32x8xf32>
    %58 = vector.extract_strided_slice %43 {offsets = [0, 3], sizes = [32, 1], strides = [1, 1]} : vector<32x10xf32> to vector<32x1xf32>
    %59 = vector.extract_strided_slice %41 {offsets = [0, 24], sizes = [32, 8], strides = [1, 1]} : vector<32x80xf32> to vector<32x8xf32>
    %60 = vector.broadcast %58 : vector<32x1xf32> to vector<32x8xf32>
    %61 = arith.mulf %60, %59 : vector<32x8xf32>
    %62 = arith.addf %57, %61 : vector<32x8xf32>
    %63 = vector.extract_strided_slice %43 {offsets = [0, 4], sizes = [32, 1], strides = [1, 1]} : vector<32x10xf32> to vector<32x1xf32>
    %64 = vector.extract_strided_slice %41 {offsets = [0, 32], sizes = [32, 8], strides = [1, 1]} : vector<32x80xf32> to vector<32x8xf32>
    %65 = vector.broadcast %63 : vector<32x1xf32> to vector<32x8xf32>
    %66 = arith.mulf %65, %64 : vector<32x8xf32>
    %67 = arith.addf %62, %66 : vector<32x8xf32>
    %68 = vector.extract_strided_slice %43 {offsets = [0, 5], sizes = [32, 1], strides = [1, 1]} : vector<32x10xf32> to vector<32x1xf32>
    %69 = vector.extract_strided_slice %41 {offsets = [0, 40], sizes = [32, 8], strides = [1, 1]} : vector<32x80xf32> to vector<32x8xf32>
    %70 = vector.broadcast %68 : vector<32x1xf32> to vector<32x8xf32>
    %71 = arith.mulf %70, %69 : vector<32x8xf32>
    %72 = arith.addf %67, %71 : vector<32x8xf32>
    %73 = vector.extract_strided_slice %43 {offsets = [0, 6], sizes = [32, 1], strides = [1, 1]} : vector<32x10xf32> to vector<32x1xf32>
    %74 = vector.extract_strided_slice %41 {offsets = [0, 48], sizes = [32, 8], strides = [1, 1]} : vector<32x80xf32> to vector<32x8xf32>
    %75 = vector.broadcast %73 : vector<32x1xf32> to vector<32x8xf32>
    %76 = arith.mulf %75, %74 : vector<32x8xf32>
    %77 = arith.addf %72, %76 : vector<32x8xf32>
    %78 = vector.extract_strided_slice %43 {offsets = [0, 7], sizes = [32, 1], strides = [1, 1]} : vector<32x10xf32> to vector<32x1xf32>
    %79 = vector.extract_strided_slice %41 {offsets = [0, 56], sizes = [32, 8], strides = [1, 1]} : vector<32x80xf32> to vector<32x8xf32>
    %80 = vector.broadcast %78 : vector<32x1xf32> to vector<32x8xf32>
    %81 = arith.mulf %80, %79 : vector<32x8xf32>
    %82 = arith.addf %77, %81 : vector<32x8xf32>
    %83 = vector.extract_strided_slice %43 {offsets = [0, 8], sizes = [32, 1], strides = [1, 1]} : vector<32x10xf32> to vector<32x1xf32>
    %84 = vector.extract_strided_slice %41 {offsets = [0, 64], sizes = [32, 8], strides = [1, 1]} : vector<32x80xf32> to vector<32x8xf32>
    %85 = vector.broadcast %83 : vector<32x1xf32> to vector<32x8xf32>
    %86 = arith.mulf %85, %84 : vector<32x8xf32>
    %87 = arith.addf %82, %86 : vector<32x8xf32>
    %88 = vector.extract_strided_slice %43 {offsets = [0, 9], sizes = [32, 1], strides = [1, 1]} : vector<32x10xf32> to vector<32x1xf32>
    %89 = vector.extract_strided_slice %41 {offsets = [0, 72], sizes = [32, 8], strides = [1, 1]} : vector<32x80xf32> to vector<32x8xf32>
    %90 = vector.broadcast %88 : vector<32x1xf32> to vector<32x8xf32>
    %91 = arith.mulf %90, %89 : vector<32x8xf32>
    %92 = arith.addf %87, %91 : vector<32x8xf32>
    %c0_22 = arith.constant 0 : index
    %c0_23 = arith.constant 0 : index
    %93 = vector.load %arg6[%c0_22, %c0_23] : memref<32x8xf32, #tpu.memory_space<vmem>>, vector<32x8xf32>
    tpu.vector_store %arg6[%c0_22, %c0_23], %92 {strides = array<i32>} : memref<32x8xf32, #tpu.memory_space<vmem>>, vector<32x8xf32>,
    return
  }
}

</mosaic_0001>

<llo_original>
// kernel: tpu_custom_call.1
$region0: #{tpu_custom_call.1}
  #allocation0 [shape = 'u32[]', space=smem, size = 0x4, offset = 0x4, fixed_abs, tag = 'smem constant byte address 0x4 - core index']
  #allocation1 [shape = 'u32[144,128]{1,0:T(1,128)}', space=vmem, size = 0x12000, scoped, tag = 'internal scratch']
  %s0 = inlined_call_operand.vmem [shape: f32[2,16,4], index: 0, kind: input, shape index: {}]
  %s1 = inlined_call_operand.vmem [shape: f32[16,10], index: 1, kind: input, shape index: {}]
  %s2 = inlined_call_operand.vmem [shape: f32[16,8], index: 2, kind: input, shape index: {}]
  %s3 = inlined_call_operand.vmem [shape: f32[8,16], index: 3, kind: input, shape index: {}]
  %s4 = inlined_call_operand.vmem [shape: f32[12,80], index: 4, kind: input, shape index: {}]
  %s5 = inlined_call_operand.vmem [shape: f32[1,80], index: 5, kind: input, shape index: {}]
  %s6 = inlined_call_operand.vmem [shape: f32[32,8], index: 6, kind: output, shape index: {}]
  %s7 = sld [smem:[#allocation0]]
  $region34: #{tpu_custom_call.1} parent=0
    _
  %s9 = ssub.s32 1, %s7
  %s10 = scalar_select 0, %s9, %s7
  // Predicated region
  $region2: #{tpu_custom_call.1} parent=0 // pred_check
    _
  $region3: #{tpu_custom_call.1} parent=0 // pred_check_branch
    %12 = sbr.rel (0) target = $region5
  $region4: #{tpu_custom_call.1} parent=0 // pred_region
    _
  $region5: #{tpu_custom_call.1} parent=0 // pred_fallthru
    _
  // Predicated region
  $region6: #{tpu_custom_call.1} parent=0 // pred_check
    _
  $region7: #{tpu_custom_call.1} parent=0 // pred_check_branch
    %14 = sbr.rel (0) target = $region9
  $region8: #{tpu_custom_call.1} parent=0 // pred_region
    _
  $region9: #{tpu_custom_call.1} parent=0 // pred_fallthru
    _
  // Predicated region
  $region10: #{tpu_custom_call.1} parent=0 // pred_check
    _
  $region11: #{tpu_custom_call.1} parent=0 // pred_check_branch
    %16 = sbr.rel (0) target = $region13
  $region12: #{tpu_custom_call.1} parent=0 // pred_region
    _
  $region13: #{tpu_custom_call.1} parent=0 // pred_fallthru
    _
  // Predicated region
  $region14: #{tpu_custom_call.1} parent=0 // pred_check
    _
  $region15: #{tpu_custom_call.1} parent=0 // pred_check_branch
    %18 = sbr.rel (0) target = $region17
  $region16: #{tpu_custom_call.1} parent=0 // pred_region
    _
  $region17: #{tpu_custom_call.1} parent=0 // pred_fallthru
    _
  // Predicated region
  $region18: #{tpu_custom_call.1} parent=0 // pred_check
    _
  $region19: #{tpu_custom_call.1} parent=0 // pred_check_branch
    %20 = sbr.rel (0) target = $region21
  $region20: #{tpu_custom_call.1} parent=0 // pred_region
    _
  $region21: #{tpu_custom_call.1} parent=0 // pred_fallthru
    _
  // Predicated region
  $region22: #{tpu_custom_call.1} parent=0 // pred_check
    _
  $region23: #{tpu_custom_call.1} parent=0 // pred_check_branch
    %22 = sbr.rel (0) target = $region25
  $region24: #{tpu_custom_call.1} parent=0 // pred_region
    _
  $region25: #{tpu_custom_call.1} parent=0 // pred_fallthru
    _
  %v23 = vld [vmem:[%s2] sm:$0xff]
  %v24 = vld [vmem:[%s2 + $0x8] sm:$0xff]
  %v25 = vld [vmem:[%s3] sm:$0xff]
  %vm26 = vcmask 64512
  %v28 = vsel %vm26, %v23, 0
  %v31 = vsel %vm26, %v24, 0
  %33 = vmatprep.subr.mxu0 0.0
  %34 = vmatpush1.msra.mxu0 %v25
  %35 = vmatprep.subr.mxu0 0.0
  %36 = vmatpush1.msra.mxu0 0.0
  %37 = vmatprep.subr.mxu0 0.0
  %38 = vmatpush1.msra.mxu0 0.0
  %39 = vmatprep.subr.mxu0 0.0
  %40 = vmatpush1.msra.mxu0 0.0
  %41 = vmatprep.subr.mxu0 0.0
  %42 = vmatpush1.msra.mxu0 0.0
  %43 = vmatprep.subr.mxu0 0.0
  %44 = vmatpush1.msra.mxu0 0.0
  %45 = vmatprep.subr.mxu0 0.0
  %46 = vmatpush1.msra.mxu0 0.0
  %47 = vmatprep.subr.mxu0 0.0
  %48 = vmatpush1.msra.mxu0 0.0
  %49 = vmatprep.subr.mxu0 0.0
  %50 = vmatpush1.msra.mxu0 0.0
  %51 = vmatprep.subr.mxu0 0.0
  %52 = vmatpush1.msra.mxu0 0.0
  %53 = vmatprep.subr.mxu0 0.0
  %54 = vmatpush1.msra.mxu0 0.0
  %55 = vmatprep.subr.mxu0 0.0
  %56 = vmatpush1.msra.mxu0 0.0
  %57 = vmatprep.subr.mxu0 0.0
  %58 = vmatpush1.msra.mxu0 0.0
  %59 = vmatprep.subr.mxu0 0.0
  %60 = vmatpush1.msra.mxu0 0.0
  %61 = vmatprep.subr.mxu0 0.0
  %62 = vmatpush1.msra.mxu0 0.0
  %63 = vmatprep.subr.mxu0 0.0
  %64 = vmatpush1.msra.mxu0 0.0
  %65 = vmatprep.subr.mxu0 0.0
  %66 = vmatpush1.msra.mxu0 0.0
  %67 = vmatprep.subr.mxu0 0.0
  %68 = vmatpush1.msra.mxu0 0.0
  %69 = vmatprep.subr.mxu0 0.0
  %70 = vmatpush1.msra.mxu0 0.0
  %71 = vmatprep.subr.mxu0 0.0
  %72 = vmatpush1.msra.mxu0 0.0
  %73 = vmatprep.subr.mxu0 0.0
  %74 = vmatpush1.msra.mxu0 0.0
  %75 = vmatprep.subr.mxu0 0.0
  %76 = vmatpush1.msra.mxu0 0.0
  %77 = vmatprep.subr.mxu0 0.0
  %78 = vmatpush1.msra.mxu0 0.0
  %79 = vmatprep.subr.mxu0 0.0
  %80 = vmatpush1.msra.mxu0 0.0
  %81 = vmatprep.subr.mxu0 0.0
  %82 = vmatpush1.msra.mxu0 0.0
  %83 = vmatprep.subr.mxu0 0.0
  %84 = vmatpush1.msra.mxu0 0.0
  %85 = vmatprep.subr.mxu0 0.0
  %86 = vmatpush1.msra.mxu0 0.0
  %87 = vmatprep.subr.mxu0 0.0
  %88 = vmatpush1.msra.mxu0 0.0
  %89 = vmatprep.subr.mxu0 0.0
  %90 = vmatpush1.msra.mxu0 0.0
  %91 = vmatprep.subr.mxu0 0.0
  %92 = vmatpush1.msra.mxu0 0.0
  %93 = vmatprep.subr.mxu0 0.0
  %94 = vmatpush1.msra.mxu0 0.0
  %95 = vmatprep.subr.mxu0 0.0
  %96 = vmatpush1.msra.mxu0 0.0
  %97 = vmatprep.mubr.f32.mxu0 0.0
  %98 = vmatmul.mubr.f32.gmra.mrb[0].mxu0 %v28
  %v99 = vpop.f32.mrb[0].mxu0
  %v100 = vadd.f32 0.0, %v99
  %v101 = vpop.f32.mrb[0].mxu0
  %102 = vmatprep.mubr.f32.mxu0 0.0
  %103 = vmatmul.mubr.f32.gmra.mrb[0].mxu0 %v31
  %v104 = vpop.f32.mrb[0].mxu0
  %v105 = vadd.f32 0.0, %v104
  %v106 = vpop.f32.mrb[0].mxu0
  %107 = vdwg.mxu0
  %v108 = vmax.f32 %v100, 0.0
  %v109 = vmax.f32 %v105, 0.0
  %vm110 = vcmask 130048
  %v111 = vsel %vm110, %v108, -inf
  %112 = vmax.xlane.f32.xlu0 %v111
  %v113 = vpop.xlane.xlu0 %112
  %v114 = vsel %vm110, %v109, -inf
  %115 = vmax.xlane.f32.xlu0 %v114
  %v116 = vpop.xlane.xlu0 %115
  %v117 = vsub.f32 %v108, %v113
  %v118 = vsub.f32 %v109, %v116
  %v119 = vmul.f32 %v117, 1.442695
  %v120 = vpow.pop %v119
  %v121 = vmul.f32 %v118, 1.442695
  %v122 = vpow.pop %v121
  %v123 = vsel %vm110, %v120, 0.0
  %124 = vadd.xlane.f32.xlu0 %v123
  %v125 = vpop.xlane.xlu0 %124
  %v126 = vsel %vm110, %v122, 0.0
  %127 = vadd.xlane.f32.xlu0 %v126
  %v128 = vpop.xlane.xlu0 %127
  %v129 = vrcp.pop %v125
  %v130 = vmul.f32 %v120, %v129
  %v131 = vrcp.pop %v128
  %v132 = vmul.f32 %v122, %v131
  %v133 = vlaneseq
  %v134 = vshrl.u32 %v133, 7
  %v135 = vadd.s32 %v134, 8
  %v136 = vlaneseq
  %v137 = vand.u32 %v136, 127
  %vm138 = vcmp.eq.s32.totalorder %v134, %v137
  %vm139 = vcmp.eq.s32.totalorder %v135, %v137
  %v140 = vsel %vm138, 1, 0
  %v141 = vsel %vm139, 1, 0
  %v142 = vcvt.s32.f32 %v140
  %v143 = vcvt.s32.f32 %v141
  %v145 = vsel %vm110, %v130, 0
  %v148 = vsel %vm110, %v132, 0
  %150 = vmatprep.subr.mxu0 0.0
  %151 = vmatpush1.msra.mxu0 %v130
  %152 = vmatprep.subr.mxu0 0.0
  %153 = vmatpush1.msra.mxu0 %v132
  %154 = vmatprep.subr.mxu0 0.0
  %155 = vmatpush1.msra.mxu0 0.0
  %156 = vmatprep.subr.mxu0 0.0
  %157 = vmatpush1.msra.mxu0 0.0
  %158 = vmatprep.subr.mxu0 0.0
  %159 = vmatpush1.msra.mxu0 0.0
  %160 = vmatprep.subr.mxu0 0.0
  %161 = vmatpush1.msra.mxu0 0.0
  %162 = vmatprep.subr.mxu0 0.0
  %163 = vmatpush1.msra.mxu0 0.0
  %164 = vmatprep.subr.mxu0 0.0
  %165 = vmatpush1.msra.mxu0 0.0
  %166 = vmatprep.subr.mxu0 0.0
  %167 = vmatpush1.msra.mxu0 0.0
  %168 = vmatprep.subr.mxu0 0.0
  %169 = vmatpush1.msra.mxu0 0.0
  %170 = vmatprep.subr.mxu0 0.0
  %171 = vmatpush1.msra.mxu0 0.0
  %172 = vmatprep.subr.mxu0 0.0
  %173 = vmatpush1.msra.mxu0 0.0
  %174 = vmatprep.subr.mxu0 0.0
  %175 = vmatpush1.msra.mxu0 0.0
  %176 = vmatprep.subr.mxu0 0.0
  %177 = vmatpush1.msra.mxu0 0.0
  %178 = vmatprep.subr.mxu0 0.0
  %179 = vmatpush1.msra.mxu0 0.0
  %180 = vmatprep.subr.mxu0 0.0
  %181 = vmatpush1.msra.mxu0 0.0
  %182 = vmatprep.subr.mxu0 0.0
  %183 = vmatpush1.msra.mxu0 0.0
  %184 = vmatprep.subr.mxu0 0.0
  %185 = vmatpush1.msra.mxu0 0.0
  %186 = vmatprep.subr.mxu0 0.0
  %187 = vmatpush1.msra.mxu0 0.0
  %188 = vmatprep.subr.mxu0 0.0
  %189 = vmatpush1.msra.mxu0 0.0
  %190 = vmatprep.subr.mxu0 0.0
  %191 = vmatpush1.msra.mxu0 0.0
  %192 = vmatprep.subr.mxu0 0.0
  %193 = vmatpush1.msra.mxu0 0.0
  %194 = vmatprep.subr.mxu0 0.0
  %195 = vmatpush1.msra.mxu0 0.0
  %196 = vmatprep.subr.mxu0 0.0
  %197 = vmatpush1.msra.mxu0 0.0
  %198 = vmatprep.subr.mxu0 0.0
  %199 = vmatpush1.msra.mxu0 0.0
  %200 = vmatprep.subr.mxu0 0.0
  %201 = vmatpush1.msra.mxu0 0.0
  %202 = vmatprep.subr.mxu0 0.0
  %203 = vmatpush1.msra.mxu0 0.0
  %204 = vmatprep.subr.mxu0 0.0
  %205 = vmatpush1.msra.mxu0 0.0
  %206 = vmatprep.subr.mxu0 0.0
  %207 = vmatpush1.msra.mxu0 0.0
  %208 = vmatprep.subr.mxu0 0.0
  %209 = vmatpush1.msra.mxu0 0.0
  %210 = vmatprep.subr.mxu0 0.0
  %211 = vmatpush1.msra.mxu0 0.0
  %212 = vmatprep.subr.mxu0 0.0
  %213 = vmatpush1.msra.mxu0 0.0
  %214 = vmatprep.mubr.f32.mxu0 0.0
  %215 = vmatmul.mubr.f32.gmra.mrb[0].mxu0 %v145
  %v216 = vpop.f32.mrb[0].mxu0
  %v217 = vadd.f32 0.0, %v216
  %v218 = vpop.f32.mrb[0].mxu0
  %219 = vmatprep.mubr.f32.mxu0 0.0
  %220 = vmatmul.mubr.f32.gmra.mrb[0].mxu0 %v148
  %v221 = vpop.f32.mrb[0].mxu0
  %v222 = vadd.f32 0.0, %v221
  %v223 = vpop.f32.mrb[0].mxu0
  %224 = vdwg.mxu0
  %v225 = vmul.f32 %v217, 2.0
  %v226 = vmul.f32 %v222, 2.0
  %v227 = vsub.f32 %v225, %v142
  %v228 = vsub.f32 %v226, %v143
  %v229 = vld [vmem:[%s0] sm:$0xff]
  %v230 = vld [vmem:[%s0 + $0x8] sm:$0xff]
  %v232 = vsel %vm110, %v227, 0
  %v235 = vsel %vm110, %v228, 0
  %237 = vmatprep.subr.mxu0 0.0
  %238 = vmatpush1.msra.mxu0 %v229
  %239 = vmatprep.subr.mxu0 0.0
  %240 = vmatpush1.msra.mxu0 %v230
  %241 = vmatprep.subr.mxu0 0.0
  %242 = vmatpush1.msra.mxu0 0.0
  %243 = vmatprep.subr.mxu0 0.0
  %244 = vmatpush1.msra.mxu0 0.0
  %245 = vmatprep.subr.mxu0 0.0
  %246 = vmatpush1.msra.mxu0 0.0
  %247 = vmatprep.subr.mxu0 0.0
  %248 = vmatpush1.msra.mxu0 0.0
  %249 = vmatprep.subr.mxu0 0.0
  %250 = vmatpush1.msra.mxu0 0.0
  %251 = vmatprep.subr.mxu0 0.0
  %252 = vmatpush1.msra.mxu0 0.0
  %253 = vmatprep.subr.mxu0 0.0
  %254 = vmatpush1.msra.mxu0 0.0
  %255 = vmatprep.subr.mxu0 0.0
  %256 = vmatpush1.msra.mxu0 0.0
  %257 = vmatprep.subr.mxu0 0.0
  %258 = vmatpush1.msra.mxu0 0.0
  %259 = vmatprep.subr.mxu0 0.0
  %260 = vmatpush1.msra.mxu0 0.0
  %261 = vmatprep.subr.mxu0 0.0
  %262 = vmatpush1.msra.mxu0 0.0
  %263 = vmatprep.subr.mxu0 0.0
  %264 = vmatpush1.msra.mxu0 0.0
  %265 = vmatprep.subr.mxu0 0.0
  %266 = vmatpush1.msra.mxu0 0.0
  %267 = vmatprep.subr.mxu0 0.0
  %268 = vmatpush1.msra.mxu0 0.0
  %269 = vmatprep.subr.mxu0 0.0
  %270 = vmatpush1.msra.mxu0 0.0
  %271 = vmatprep.subr.mxu0 0.0
  %272 = vmatpush1.msra.mxu0 0.0
  %273 = vmatprep.subr.mxu0 0.0
  %274 = vmatpush1.msra.mxu0 0.0
  %275 = vmatprep.subr.mxu0 0.0
  %276 = vmatpush1.msra.mxu0 0.0
  %277 = vmatprep.subr.mxu0 0.0
  %278 = vmatpush1.msra.mxu0 0.0
  %279 = vmatprep.subr.mxu0 0.0
  %280 = vmatpush1.msra.mxu0 0.0
  %281 = vmatprep.subr.mxu0 0.0
  %282 = vmatpush1.msra.mxu0 0.0
  %283 = vmatprep.subr.mxu0 0.0
  %284 = vmatpush1.msra.mxu0 0.0
  %285 = vmatprep.subr.mxu0 0.0
  %286 = vmatpush1.msra.mxu0 0.0
  %287 = vmatprep.subr.mxu0 0.0
  %288 = vmatpush1.msra.mxu0 0.0
  %289 = vmatprep.subr.mxu0 0.0
  %290 = vmatpush1.msra.mxu0 0.0
  %291 = vmatprep.subr.mxu0 0.0
  %292 = vmatpush1.msra.mxu0 0.0
  %293 = vmatprep.subr.mxu0 0.0
  %294 = vmatpush1.msra.mxu0 0.0
  %295 = vmatprep.subr.mxu0 0.0
  %296 = vmatpush1.msra.mxu0 0.0
  %297 = vmatprep.subr.mxu0 0.0
  %298 = vmatpush1.msra.mxu0 0.0
  %299 = vmatprep.subr.mxu0 0.0
  %300 = vmatpush1.msra.mxu0 0.0
  %301 = vmatprep.mubr.f32.mxu0 0.0
  %302 = vmatmul.mubr.f32.gmra.mrb[0].mxu0 %v145
  %v303 = vpop.f32.mrb[0].mxu0
  %v304 = vadd.f32 0.0, %v303
  %v305 = vpop.f32.mrb[0].mxu0
  %306 = vmatprep.mubr.f32.mxu0 0.0
  %307 = vmatmul.mubr.f32.gmra.mrb[0].mxu0 %v148
  %v308 = vpop.f32.mrb[0].mxu0
  %v309 = vadd.f32 0.0, %v308
  %v310 = vpop.f32.mrb[0].mxu0
  %311 = vmatprep.mubr.f32.mxu0 0.0
  %312 = vmatmul.mubr.f32.gmra.mrb[0].mxu0 %v232
  %v313 = vpop.f32.mrb[0].mxu0
  %v314 = vadd.f32 0.0, %v313
  %v315 = vpop.f32.mrb[0].mxu0
  %316 = vmatprep.mubr.f32.mxu0 0.0
  %317 = vmatmul.mubr.f32.gmra.mrb[0].mxu0 %v235
  %v318 = vpop.f32.mrb[0].mxu0
  %v319 = vadd.f32 0.0, %v318
  %v320 = vpop.f32.mrb[0].mxu0
  %321 = vdwg.mxu0
  %324 = vrot.lane.b32.xlu0 %v304, 4
  %v325 = vpop.permute.xlu0 %324
  %326 = vrot.lane.b32.xlu0 %v309, 4
  %v327 = vpop.permute.xlu0 %326
  %332 = vrot.lane.b32.xlu0 %v314, 8
  %v333 = vpop.permute.xlu0 %332
  %334 = vrot.lane.b32.xlu0 %v319, 8
  %v335 = vpop.permute.xlu0 %334
  %vm338 = vcmask 31744
  %v339 = vsel %vm338, %v229, %v325
  %v340 = vsel %vm338, %v230, %v327
  %v341 = vsel %vm26, %v339, %v333
  %v342 = vsel %vm26, %v340, %v335
  %s343 = scalar_lea.vmem %s0, 16
  %v344 = vld [vmem:[%s343] sm:$0xff]
  %v345 = vld [vmem:[%s343 + $0x8] sm:$0xff]
  %346 = vmatprep.subr.mxu0 0.0
  %347 = vmatpush1.msra.mxu0 %v344
  %348 = vmatprep.subr.mxu0 0.0
  %349 = vmatpush1.msra.mxu0 %v345
  %350 = vmatprep.subr.mxu0 0.0
  %351 = vmatpush1.msra.mxu0 0.0
  %352 = vmatprep.subr.mxu0 0.0
  %353 = vmatpush1.msra.mxu0 0.0
  %354 = vmatprep.subr.mxu0 0.0
  %355 = vmatpush1.msra.mxu0 0.0
  %356 = vmatprep.subr.mxu0 0.0
  %357 = vmatpush1.msra.mxu0 0.0
  %358 = vmatprep.subr.mxu0 0.0
  %359 = vmatpush1.msra.mxu0 0.0
  %360 = vmatprep.subr.mxu0 0.0
  %361 = vmatpush1.msra.mxu0 0.0
  %362 = vmatprep.subr.mxu0 0.0
  %363 = vmatpush1.msra.mxu0 0.0
  %364 = vmatprep.subr.mxu0 0.0
  %365 = vmatpush1.msra.mxu0 0.0
  %366 = vmatprep.subr.mxu0 0.0
  %367 = vmatpush1.msra.mxu0 0.0
  %368 = vmatprep.subr.mxu0 0.0
  %369 = vmatpush1.msra.mxu0 0.0
  %370 = vmatprep.subr.mxu0 0.0
  %371 = vmatpush1.msra.mxu0 0.0
  %372 = vmatprep.subr.mxu0 0.0
  %373 = vmatpush1.msra.mxu0 0.0
  %374 = vmatprep.subr.mxu0 0.0
  %375 = vmatpush1.msra.mxu0 0.0
  %376 = vmatprep.subr.mxu0 0.0
  %377 = vmatpush1.msra.mxu0 0.0
  %378 = vmatprep.subr.mxu0 0.0
  %379 = vmatpush1.msra.mxu0 0.0
  %380 = vmatprep.subr.mxu0 0.0
  %381 = vmatpush1.msra.mxu0 0.0
  %382 = vmatprep.subr.mxu0 0.0
  %383 = vmatpush1.msra.mxu0 0.0
  %384 = vmatprep.subr.mxu0 0.0
  %385 = vmatpush1.msra.mxu0 0.0
  %386 = vmatprep.subr.mxu0 0.0
  %387 = vmatpush1.msra.mxu0 0.0
  %388 = vmatprep.subr.mxu0 0.0
  %389 = vmatpush1.msra.mxu0 0.0
  %390 = vmatprep.subr.mxu0 0.0
  %391 = vmatpush1.msra.mxu0 0.0
  %392 = vmatprep.subr.mxu0 0.0
  %393 = vmatpush1.msra.mxu0 0.0
  %394 = vmatprep.subr.mxu0 0.0
  %395 = vmatpush1.msra.mxu0 0.0
  %396 = vmatprep.subr.mxu0 0.0
  %397 = vmatpush1.msra.mxu0 0.0
  %398 = vmatprep.subr.mxu0 0.0
  %399 = vmatpush1.msra.mxu0 0.0
  %400 = vmatprep.subr.mxu0 0.0
  %401 = vmatpush1.msra.mxu0 0.0
  %402 = vmatprep.subr.mxu0 0.0
  %403 = vmatpush1.msra.mxu0 0.0
  %404 = vmatprep.subr.mxu0 0.0
  %405 = vmatpush1.msra.mxu0 0.0
  %406 = vmatprep.subr.mxu0 0.0
  %407 = vmatpush1.msra.mxu0 0.0
  %408 = vmatprep.subr.mxu0 0.0
  %409 = vmatpush1.msra.mxu0 0.0
  %410 = vmatprep.mubr.f32.mxu0 0.0
  %411 = vmatmul.mubr.f32.gmra.mrb[0].mxu0 %v145
  %v412 = vpop.f32.mrb[0].mxu0
  %v413 = vadd.f32 0.0, %v412
  %v414 = vpop.f32.mrb[0].mxu0
  %415 = vmatprep.mubr.f32.mxu0 0.0
  %416 = vmatmul.mubr.f32.gmra.mrb[0].mxu0 %v148
  %v417 = vpop.f32.mrb[0].mxu0
  %v418 = vadd.f32 0.0, %v417
  %v419 = vpop.f32.mrb[0].mxu0
  %420 = vmatprep.mubr.f32.mxu0 0.0
  %421 = vmatmul.mubr.f32.gmra.mrb[0].mxu0 %v232
  %v422 = vpop.f32.mrb[0].mxu0
  %v423 = vadd.f32 0.0, %v422
  %v424 = vpop.f32.mrb[0].mxu0
  %425 = vmatprep.mubr.f32.mxu0 0.0
  %426 = vmatmul.mubr.f32.gmra.mrb[0].mxu0 %v235
  %v427 = vpop.f32.mrb[0].mxu0
  %v428 = vadd.f32 0.0, %v427
  %v429 = vpop.f32.mrb[0].mxu0
  %430 = vdwg.mxu0
  %433 = vrot.lane.b32.xlu0 %v413, 4
  %v434 = vpop.permute.xlu0 %433
  %435 = vrot.lane.b32.xlu0 %v418, 4
  %v436 = vpop.permute.xlu0 %435
  %441 = vrot.lane.b32.xlu0 %v423, 8
  %v442 = vpop.permute.xlu0 %441
  %443 = vrot.lane.b32.xlu0 %v428, 8
  %v444 = vpop.permute.xlu0 %443
  %v447 = vsel %vm338, %v344, %v434
  %v448 = vsel %vm338, %v345, %v436
  %v449 = vsel %vm26, %v447, %v442
  %v450 = vsel %vm26, %v448, %v444
  %v451 = vld [vmem:[%s4] sm:$0xff]
  %v452 = vld [vmem:[%s4 + $0x8] sm:$0xf]
  %v453 = vld [vmem:[%s5] sm:$0x1]
  %v455 = vlaneseq
  %v456 = vshrl.u32 %v455, 7
  %v457 = vsub.s32 0, %v456
  %v458 = vrot.slane %v453, %v457
  %vm460 = vcmask 97280
  %v462 = vsel %vm460, %v341, 0
  %v465 = vsel %vm460, %v342, 0
  %v468 = vsel %vm460, %v449, 0
  %v471 = vsel %vm460, %v450, 0
  %vm473 = vcmask 1043456
  %v475 = vsel %vm473, %v452, 0
  %477 = vmatprep.subr.mxu0 0.0
  %478 = vmatpush1.msra.mxu0 %v451
  %479 = vmatprep.subr.mxu0 0.0
  %480 = vmatpush1.msra.mxu0 %v475
  %481 = vmatprep.subr.mxu0 0.0
  %482 = vmatpush1.msra.mxu0 0.0
  %483 = vmatprep.subr.mxu0 0.0
  %484 = vmatpush1.msra.mxu0 0.0
  %485 = vmatprep.subr.mxu0 0.0
  %486 = vmatpush1.msra.mxu0 0.0
  %487 = vmatprep.subr.mxu0 0.0
  %488 = vmatpush1.msra.mxu0 0.0
  %489 = vmatprep.subr.mxu0 0.0
  %490 = vmatpush1.msra.mxu0 0.0
  %491 = vmatprep.subr.mxu0 0.0
  %492 = vmatpush1.msra.mxu0 0.0
  %493 = vmatprep.subr.mxu0 0.0
  %494 = vmatpush1.msra.mxu0 0.0
  %495 = vmatprep.subr.mxu0 0.0
  %496 = vmatpush1.msra.mxu0 0.0
  %497 = vmatprep.subr.mxu0 0.0
  %498 = vmatpush1.msra.mxu0 0.0
  %499 = vmatprep.subr.mxu0 0.0
  %500 = vmatpush1.msra.mxu0 0.0
  %501 = vmatprep.subr.mxu0 0.0
  %502 = vmatpush1.msra.mxu0 0.0
  %503 = vmatprep.subr.mxu0 0.0
  %504 = vmatpush1.msra.mxu0 0.0
  %505 = vmatprep.subr.mxu0 0.0
  %506 = vmatpush1.msra.mxu0 0.0
  %507 = vmatprep.subr.mxu0 0.0
  %508 = vmatpush1.msra.mxu0 0.0
  %509 = vmatprep.subr.mxu0 0.0
  %510 = vmatpush1.msra.mxu0 0.0
  %511 = vmatprep.subr.mxu0 0.0
  %512 = vmatpush1.msra.mxu0 0.0
  %513 = vmatprep.subr.mxu0 0.0
  %514 = vmatpush1.msra.mxu0 0.0
  %515 = vmatprep.subr.mxu0 0.0
  %516 = vmatpush1.msra.mxu0 0.0
  %517 = vmatprep.subr.mxu0 0.0
  %518 = vmatpush1.msra.mxu0 0.0
  %519 = vmatprep.subr.mxu0 0.0
  %520 = vmatpush1.msra.mxu0 0.0
  %521 = vmatprep.subr.mxu0 0.0
  %522 = vmatpush1.msra.mxu0 0.0
  %523 = vmatprep.subr.mxu0 0.0
  %524 = vmatpush1.msra.mxu0 0.0
  %525 = vmatprep.subr.mxu0 0.0
  %526 = vmatpush1.msra.mxu0 0.0
  %527 = vmatprep.subr.mxu0 0.0
  %528 = vmatpush1.msra.mxu0 0.0
  %529 = vmatprep.subr.mxu0 0.0
  %530 = vmatpush1.msra.mxu0 0.0
  %531 = vmatprep.subr.mxu0 0.0
  %532 = vmatpush1.msra.mxu0 0.0
  %533 = vmatprep.subr.mxu0 0.0
  %534 = vmatpush1.msra.mxu0 0.0
  %535 = vmatprep.subr.mxu0 0.0
  %536 = vmatpush1.msra.mxu0 0.0
  %537 = vmatprep.subr.mxu0 0.0
  %538 = vmatpush1.msra.mxu0 0.0
  %539 = vmatprep.subr.mxu0 0.0
  %540 = vmatpush1.msra.mxu0 0.0
  %541 = vmatprep.mubr.f32.mxu0 0.0
  %542 = vmatmul.mubr.f32.gmra.mrb[0].mxu0 %v462
  %v543 = vpop.f32.mrb[0].mxu0
  %v544 = vadd.f32 %v458, %v543
  %v545 = vpop.f32.mrb[0].mxu0
  %546 = vmatprep.mubr.f32.mxu0 0.0
  %547 = vmatmul.mubr.f32.gmra.mrb[0].mxu0 %v465
  %v548 = vpop.f32.mrb[0].mxu0
  %v549 = vadd.f32 %v458, %v548
  %v550 = vpop.f32.mrb[0].mxu0
  %551 = vmatprep.mubr.f32.mxu0 0.0
  %552 = vmatmul.mubr.f32.gmra.mrb[0].mxu0 %v468
  %v553 = vpop.f32.mrb[0].mxu0
  %v554 = vadd.f32 %v458, %v553
  %v555 = vpop.f32.mrb[0].mxu0
  %556 = vmatprep.mubr.f32.mxu0 0.0
  %557 = vmatmul.mubr.f32.gmra.mrb[0].mxu0 %v471
  %v558 = vpop.f32.mrb[0].mxu0
  %v559 = vadd.f32 %v458, %v558
  %v560 = vpop.f32.mrb[0].mxu0
  %561 = vdwg.mxu0
  %v562 = vld [vmem:[%s1] sm:$0xff]
  %v563 = vld [vmem:[%s1 + $0x8] sm:$0xff]
  %565 = vset.pattern.permute.xlu0 0
  %566 = vperm.xlu0 %565, %v562
  %v567 = vpop.permute.xlu0 %566
  %570 = vset.pattern.permute.xlu0 0
  %571 = vperm.xlu0 %570, %v563
  %v572 = vpop.permute.xlu0 %571
  %v574 = vmul.f32 %v567, %v544
  %v575 = vmul.f32 %v572, %v549
  %v576 = vmul.f32 %v567, %v554
  %v577 = vmul.f32 %v572, %v559
  %578 = vset.pattern.permute.xlu0 1
  %579 = vperm.xlu0 %578, %v562
  %v580 = vpop.permute.xlu0 %579
  %582 = vset.pattern.permute.xlu0 1
  %583 = vperm.xlu0 %582, %v563
  %v584 = vpop.permute.xlu0 %583
  %v586 = vmul.f32 %v580, %v544
  %v587 = vmul.f32 %v584, %v549
  %v588 = vmul.f32 %v580, %v554
  %v589 = vmul.f32 %v584, %v559
  %594 = vrot.lane.b32.xlu0 %v586, 120
  %v595 = vpop.permute.xlu0 %594
  %596 = vrot.lane.b32.xlu0 %v587, 120
  %v597 = vpop.permute.xlu0 %596
  %598 = vrot.lane.b32.xlu0 %v588, 120
  %v599 = vpop.permute.xlu0 %598
  %600 = vrot.lane.b32.xlu0 %v589, 120
  %v601 = vpop.permute.xlu0 %600
  %v606 = vadd.f32 %v574, %v595
  %v607 = vadd.f32 %v575, %v597
  %v608 = vadd.f32 %v576, %v599
  %v609 = vadd.f32 %v577, %v601
  %610 = vset.pattern.permute.xlu0 2
  %611 = vperm.xlu0 %610, %v562
  %v612 = vpop.permute.xlu0 %611
  %614 = vset.pattern.permute.xlu0 2
  %615 = vperm.xlu0 %614, %v563
  %v616 = vpop.permute.xlu0 %615
  %v618 = vmul.f32 %v612, %v544
  %v619 = vmul.f32 %v616, %v549
  %v620 = vmul.f32 %v612, %v554
  %v621 = vmul.f32 %v616, %v559
  %626 = vrot.lane.b32.xlu0 %v618, 112
  %v627 = vpop.permute.xlu0 %626
  %628 = vrot.lane.b32.xlu0 %v619, 112
  %v629 = vpop.permute.xlu0 %628
  %630 = vrot.lane.b32.xlu0 %v620, 112
  %v631 = vpop.permute.xlu0 %630
  %632 = vrot.lane.b32.xlu0 %v621, 112
  %v633 = vpop.permute.xlu0 %632
  %v638 = vadd.f32 %v606, %v627
  %v639 = vadd.f32 %v607, %v629
  %v640 = vadd.f32 %v608, %v631
  %v641 = vadd.f32 %v609, %v633
  %642 = vset.pattern.permute.xlu0 3
  %643 = vperm.xlu0 %642, %v562
  %v644 = vpop.permute.xlu0 %643
  %646 = vset.pattern.permute.xlu0 3
  %647 = vperm.xlu0 %646, %v563
  %v648 = vpop.permute.xlu0 %647
  %v650 = vmul.f32 %v644, %v544
  %v651 = vmul.f32 %v648, %v549
  %v652 = vmul.f32 %v644, %v554
  %v653 = vmul.f32 %v648, %v559
  %658 = vrot.lane.b32.xlu0 %v650, 104
  %v659 = vpop.permute.xlu0 %658
  %660 = vrot.lane.b32.xlu0 %v651, 104
  %v661 = vpop.permute.xlu0 %660
  %662 = vrot.lane.b32.xlu0 %v652, 104
  %v663 = vpop.permute.xlu0 %662
  %664 = vrot.lane.b32.xlu0 %v653, 104
  %v665 = vpop.permute.xlu0 %664
  %v670 = vadd.f32 %v638, %v659
  %v671 = vadd.f32 %v639, %v661
  %v672 = vadd.f32 %v640, %v663
  %v673 = vadd.f32 %v641, %v665
  %674 = vset.pattern.permute.xlu0 4
  %675 = vperm.xlu0 %674, %v562
  %v676 = vpop.permute.xlu0 %675
  %678 = vset.pattern.permute.xlu0 4
  %679 = vperm.xlu0 %678, %v563
  %v680 = vpop.permute.xlu0 %679
  %v682 = vmul.f32 %v676, %v544
  %v683 = vmul.f32 %v680, %v549
  %v684 = vmul.f32 %v676, %v554
  %v685 = vmul.f32 %v680, %v559
  %690 = vrot.lane.b32.xlu0 %v682, 96
  %v691 = vpop.permute.xlu0 %690
  %692 = vrot.lane.b32.xlu0 %v683, 96
  %v693 = vpop.permute.xlu0 %692
  %694 = vrot.lane.b32.xlu0 %v684, 96
  %v695 = vpop.permute.xlu0 %694
  %696 = vrot.lane.b32.xlu0 %v685, 96
  %v697 = vpop.permute.xlu0 %696
  %v702 = vadd.f32 %v670, %v691
  %v703 = vadd.f32 %v671, %v693
  %v704 = vadd.f32 %v672, %v695
  %v705 = vadd.f32 %v673, %v697
  %706 = vset.pattern.permute.xlu0 5
  %707 = vperm.xlu0 %706, %v562
  %v708 = vpop.permute.xlu0 %707
  %710 = vset.pattern.permute.xlu0 5
  %711 = vperm.xlu0 %710, %v563
  %v712 = vpop.permute.xlu0 %711
  %v714 = vmul.f32 %v708, %v544
  %v715 = vmul.f32 %v712, %v549
  %v716 = vmul.f32 %v708, %v554
  %v717 = vmul.f32 %v712, %v559
  %722 = vrot.lane.b32.xlu0 %v714, 88
  %v723 = vpop.permute.xlu0 %722
  %724 = vrot.lane.b32.xlu0 %v715, 88
  %v725 = vpop.permute.xlu0 %724
  %726 = vrot.lane.b32.xlu0 %v716, 88
  %v727 = vpop.permute.xlu0 %726
  %728 = vrot.lane.b32.xlu0 %v717, 88
  %v729 = vpop.permute.xlu0 %728
  %v734 = vadd.f32 %v702, %v723
  %v735 = vadd.f32 %v703, %v725
  %v736 = vadd.f32 %v704, %v727
  %v737 = vadd.f32 %v705, %v729
  %738 = vset.pattern.permute.xlu0 6
  %739 = vperm.xlu0 %738, %v562
  %v740 = vpop.permute.xlu0 %739
  %742 = vset.pattern.permute.xlu0 6
  %743 = vperm.xlu0 %742, %v563
  %v744 = vpop.permute.xlu0 %743
  %v746 = vmul.f32 %v740, %v544
  %v747 = vmul.f32 %v744, %v549
  %v748 = vmul.f32 %v740, %v554
  %v749 = vmul.f32 %v744, %v559
  %754 = vrot.lane.b32.xlu0 %v746, 80
  %v755 = vpop.permute.xlu0 %754
  %756 = vrot.lane.b32.xlu0 %v747, 80
  %v757 = vpop.permute.xlu0 %756
  %758 = vrot.lane.b32.xlu0 %v748, 80
  %v759 = vpop.permute.xlu0 %758
  %760 = vrot.lane.b32.xlu0 %v749, 80
  %v761 = vpop.permute.xlu0 %760
  %v766 = vadd.f32 %v734, %v755
  %v767 = vadd.f32 %v735, %v757
  %v768 = vadd.f32 %v736, %v759
  %v769 = vadd.f32 %v737, %v761
  %770 = vset.pattern.permute.xlu0 7
  %771 = vperm.xlu0 %770, %v562
  %v772 = vpop.permute.xlu0 %771
  %774 = vset.pattern.permute.xlu0 7
  %775 = vperm.xlu0 %774, %v563
  %v776 = vpop.permute.xlu0 %775
  %v778 = vmul.f32 %v772, %v544
  %v779 = vmul.f32 %v776, %v549
  %v780 = vmul.f32 %v772, %v554
  %v781 = vmul.f32 %v776, %v559
  %786 = vrot.lane.b32.xlu0 %v778, 72
  %v787 = vpop.permute.xlu0 %786
  %788 = vrot.lane.b32.xlu0 %v779, 72
  %v789 = vpop.permute.xlu0 %788
  %790 = vrot.lane.b32.xlu0 %v780, 72
  %v791 = vpop.permute.xlu0 %790
  %792 = vrot.lane.b32.xlu0 %v781, 72
  %v793 = vpop.permute.xlu0 %792
  %v798 = vadd.f32 %v766, %v787
  %v799 = vadd.f32 %v767, %v789
  %v800 = vadd.f32 %v768, %v791
  %v801 = vadd.f32 %v769, %v793
  %802 = vset.pattern.permute.xlu0 8
  %803 = vperm.xlu0 %802, %v562
  %v804 = vpop.permute.xlu0 %803
  %806 = vset.pattern.permute.xlu0 8
  %807 = vperm.xlu0 %806, %v563
  %v808 = vpop.permute.xlu0 %807
  %v810 = vmul.f32 %v804, %v544
  %v811 = vmul.f32 %v808, %v549
  %v812 = vmul.f32 %v804, %v554
  %v813 = vmul.f32 %v808, %v559
  %818 = vrot.lane.b32.xlu0 %v810, 64
  %v819 = vpop.permute.xlu0 %818
  %820 = vrot.lane.b32.xlu0 %v811, 64
  %v821 = vpop.permute.xlu0 %820
  %822 = vrot.lane.b32.xlu0 %v812, 64
  %v823 = vpop.permute.xlu0 %822
  %824 = vrot.lane.b32.xlu0 %v813, 64
  %v825 = vpop.permute.xlu0 %824
  %v830 = vadd.f32 %v798, %v819
  %v831 = vadd.f32 %v799, %v821
  %v832 = vadd.f32 %v800, %v823
  %v833 = vadd.f32 %v801, %v825
  %834 = vset.pattern.permute.xlu0 9
  %835 = vperm.xlu0 %834, %v562
  %v836 = vpop.permute.xlu0 %835
  %838 = vset.pattern.permute.xlu0 9
  %839 = vperm.xlu0 %838, %v563
  %v840 = vpop.permute.xlu0 %839
  %v842 = vmul.f32 %v836, %v544
  %v843 = vmul.f32 %v840, %v549
  %v844 = vmul.f32 %v836, %v554
  %v845 = vmul.f32 %v840, %v559
  %850 = vrot.lane.b32.xlu0 %v842, 56
  %v851 = vpop.permute.xlu0 %850
  %852 = vrot.lane.b32.xlu0 %v843, 56
  %v853 = vpop.permute.xlu0 %852
  %854 = vrot.lane.b32.xlu0 %v844, 56
  %v855 = vpop.permute.xlu0 %854
  %856 = vrot.lane.b32.xlu0 %v845, 56
  %v857 = vpop.permute.xlu0 %856
  %v862 = vadd.f32 %v830, %v851
  %v863 = vadd.f32 %v831, %v853
  %v864 = vadd.f32 %v832, %v855
  %v865 = vadd.f32 %v833, %v857
  %866 = vst.msk [vmem:[%s6] sm:$0xff] %vm26, %v862
  %867 = vst.msk [vmem:[%s6 + $0x8] sm:$0xff] %vm26, %v863
  %868 = vst.msk [vmem:[%s6 + $0x10] sm:$0xff] %vm26, %v864
  %869 = vst.msk [vmem:[%s6 + $0x18] sm:$0xff] %vm26, %v865
  // Predicated region
  $region26: #{tpu_custom_call.1} parent=0 // pred_check
    _
  $region27: #{tpu_custom_call.1} parent=0 // pred_check_branch
    %871 = sbr.rel (0) target = $region29
  $region28: #{tpu_custom_call.1} parent=0 // pred_region
    _
  $region29: #{tpu_custom_call.1} parent=0 // pred_fallthru
    _
  // Predicated region
  $region30: #{tpu_custom_call.1} parent=0 // pred_check
    _
  $region31: #{tpu_custom_call.1} parent=0 // pred_check_branch
    %873 = sbr.rel (0) target = $region33
  $region32: #{tpu_custom_call.1} parent=0 // pred_region
    _
  $region33: #{tpu_custom_call.1} parent=0 // pred_fallthru
    _

</llo_original>
